<compile_context>
chip_gen: v7x
topology: tpu7x:2x2x1
jax: 0.10.0
libtpu: 0.0.40
codegen_flags: <defaults>
</compile_context>

<pallas_src>
import functools

import jax
import jax.numpy as jnp
from jax.experimental import pallas as pl
from jax.experimental.pallas import tpu as pltpu


def _round_up(a, b):
    return (a + b - 1) // b * b


def _sublane_multiple(dtype):
    # Minimum second-minor (sublane) tile granularity by element width.
    return {4: 8, 2: 16, 1: 32}.get(jnp.dtype(dtype).itemsize, 8)


def _bias_residual_layernorm(acc_f32, b_ref, res_ref, g_ref, beta_ref, o_ref,
                             *, eps):
    # Dense bias + (eval-mode identity dropout) + residual add, all in f32.
    # TODO(synk): training-mode stochastic dropout not implemented (would use
    # pltpu.prng_seed / pltpu.prng_random_bits masking).
    h = (acc_f32
         + b_ref[...].astype(jnp.float32)
         + res_ref[...].astype(jnp.float32))
    # One-pass LayerNorm statistics over the hidden (lane) axis: E[x], E[x^2].
    mean = jnp.mean(h, axis=-1, keepdims=True)
    mean_sq = jnp.mean(h * h, axis=-1, keepdims=True)
    var = jnp.maximum(mean_sq - mean * mean, 0.0)
    norm = (h - mean) * jax.lax.rsqrt(var + eps)
    out = (norm * g_ref[...].astype(jnp.float32)
           + beta_ref[...].astype(jnp.float32))
    o_ref[...] = out.astype(o_ref.dtype)


def _fused_output_kernel(x_ref, w_ref, b_ref, res_ref, g_ref, beta_ref, o_ref,
                         *, eps):
    # Single pass over K: (tm, K) @ (K, H) on the MXU, f32 accumulation.
    acc = jnp.dot(x_ref[...], w_ref[...], preferred_element_type=jnp.float32)
    _bias_residual_layernorm(acc, b_ref, res_ref, g_ref, beta_ref, o_ref,
                             eps=eps)


def _fused_output_kernel_ksplit(x_ref, w_ref, b_ref, res_ref, g_ref, beta_ref,
                                o_ref, acc_ref, *, eps):
    # Fallback for very large K: stream K (last, "arbitrary" grid axis) into an
    # f32 VMEM accumulator; epilogue only on the last K step.
    k = pl.program_id(1)

    @pl.when(k == 0)
    def _():
        acc_ref[...] = jnp.zeros_like(acc_ref)

    acc_ref[...] += jnp.dot(x_ref[...], w_ref[...],
                            preferred_element_type=jnp.float32)

    @pl.when(k == pl.num_programs(1) - 1)
    def _():
        _bias_residual_layernorm(acc_ref[...], b_ref, res_ref, g_ref, beta_ref,
                                 o_ref, eps=eps)


def alt_roberta_output(hidden_states, input_tensor, w_dense, b_dense,
                       ln_gamma, ln_beta, *, eps=1e-12,
                       row_tile=512, k_tile=4096, matmul_dtype=None):
    """hidden_states: [B, S, intermediate], input_tensor: [B, S, hidden].

    w_dense is the nn.Linear weight in PyTorch layout [hidden, intermediate]
    ([out, in]).  If matmul_dtype is set (e.g. jnp.bfloat16) the matmul inputs
    are cast to it; accumulation and the LayerNorm epilogue remain f32.
    """
    B, S, K = hidden_states.shape
    H = input_tensor.shape[-1]
    M = B * S
    out_dtype = hidden_states.dtype

    x2 = hidden_states.reshape(M, K)
    r2 = input_tensor.reshape(M, H)
    # One-time [H, K] -> [K, H] transpose so the kernel runs the native
    # MK x KN MXU form.  TODO(synk): cache this at parameter-load time.
    w_kh = w_dense.T
    if matmul_dtype is not None:
        x2 = x2.astype(matmul_dtype)
        w_kh = w_kh.astype(matmul_dtype)

    b2 = b_dense.reshape(1, H)
    g2 = ln_gamma.reshape(1, H)
    be2 = ln_beta.reshape(1, H)

    # ---- row tiling: sublane-aligned, >=2 tiles when possible (v7x 2x TC) ---
    sub = max(_sublane_multiple(x2.dtype), _sublane_multiple(r2.dtype),
              _sublane_multiple(out_dtype))
    tm = _round_up(min(row_tile, M), sub)
    if pl.cdiv(M, tm) < 2 and M > sub:
        tm = _round_up(pl.cdiv(M, 2), sub)
    n_rows = pl.cdiv(M, tm)

    x_it = x2.dtype.itemsize
    w_it = w_kh.dtype.itemsize
    r_it = r2.dtype.itemsize
    o_it = jnp.dtype(out_dtype).itemsize
    small_bytes = (b2.size + g2.size + be2.size) * 4
    cost = pl.CostEstimate(
        flops=2 * M * K * H,
        transcendentals=M,
        bytes_accessed=(M * K * x_it + K * H * w_it + M * H * r_it
                        + M * H * o_it + small_bytes))

    if K <= k_tile:
        # ----- main path: K whole, weight VMEM-resident, no accumulator -----
        # VMEM budget: double-buffered blocks (the constant-index weight is
        # only DMA'd once, but account for both buffers) + epilogue temps.
        vmem = (2 * (tm * K * x_it + K * H * w_it + tm * H * r_it
                     + tm * H * o_it + small_bytes)
                + 4 * tm * H * 4 + (2 << 20))
        out2 = pl.pallas_call(
            functools.partial(_fused_output_kernel, eps=eps),
            out_shape=jax.ShapeDtypeStruct((M, H), out_dtype),
            grid_spec=pltpu.PrefetchScalarGridSpec(
                num_scalar_prefetch=0,
                grid=(n_rows,),
                in_specs=[
                    pl.BlockSpec((tm, K), lambda i: (i, 0)),   # x row tile
                    pl.BlockSpec((K, H), lambda i: (0, 0)),    # weight (resident)
                    pl.BlockSpec((1, H), lambda i: (0, 0)),    # dense bias
                    pl.BlockSpec((tm, H), lambda i: (i, 0)),   # residual tile
                    pl.BlockSpec((1, H), lambda i: (0, 0)),    # LN gamma
                    pl.BlockSpec((1, H), lambda i: (0, 0)),    # LN beta
                ],
                out_specs=pl.BlockSpec((tm, H), lambda i: (i, 0)),
            ),
            compiler_params=pltpu.CompilerParams(
                dimension_semantics=("parallel",),
                vmem_limit_bytes=min(int(vmem), 120 * 1024 * 1024)),
            cost_estimate=cost,
        )(x2, w_kh, b2, r2, g2, be2)
        return out2.reshape(B, S, H)

    # ----- fallback: stream K (only for K > k_tile) --------------------------
    # Prefer a 128-multiple tk that divides K so K never needs padding.
    tk = None
    cand = (min(k_tile, K) // 128) * 128
    while cand >= 128:
        if K % cand == 0:
            tk = cand
            break
        cand -= 128
    K_eff = K
    if tk is None:
        tk = min(_round_up(k_tile, 128), _round_up(K, 128))
        K_eff = _round_up(K, tk)
        x2 = jnp.pad(x2, ((0, 0), (0, K_eff - K)))
        w_kh = jnp.pad(w_kh, ((0, K_eff - K), (0, 0)))
    n_k = K_eff // tk

    vmem = (2 * (tm * tk * x_it + tk * H * w_it + tm * H * r_it
                 + tm * H * o_it + small_bytes)
            + tm * H * 4 + 4 * tm * H * 4 + (2 << 20))
    out2 = pl.pallas_call(
        functools.partial(_fused_output_kernel_ksplit, eps=eps),
        out_shape=jax.ShapeDtypeStruct((M, H), out_dtype),
        grid_spec=pltpu.PrefetchScalarGridSpec(
            num_scalar_prefetch=0,
            grid=(n_rows, n_k),
            in_specs=[
                pl.BlockSpec((tm, tk), lambda i, k: (i, k)),   # x tile
                pl.BlockSpec((tk, H), lambda i, k: (k, 0)),    # weight [K,H] slab
                pl.BlockSpec((1, H), lambda i, k: (0, 0)),     # dense bias
                pl.BlockSpec((tm, H), lambda i, k: (i, 0)),    # residual tile
                pl.BlockSpec((1, H), lambda i, k: (0, 0)),     # LN gamma
                pl.BlockSpec((1, H), lambda i, k: (0, 0)),     # LN beta
            ],
            out_specs=pl.BlockSpec((tm, H), lambda i, k: (i, 0)),
            scratch_shapes=[pltpu.VMEM((tm, H), jnp.float32)],  # f32 accumulator
        ),
        compiler_params=pltpu.CompilerParams(
            dimension_semantics=("parallel", "arbitrary"),
            vmem_limit_bytes=min(int(vmem), 120 * 1024 * 1024)),
        cost_estimate=cost,
    )(x2, w_kh, b2, r2, g2, be2)
    return out2.reshape(B, S, H)


def _reference(hidden_states, input_tensor, w_dense, b_dense, ln_gamma,
               ln_beta, eps=1e-12):
    h = hidden_states @ w_dense.T + b_dense
    h = h + input_tensor
    mean = jnp.mean(h, axis=-1, keepdims=True)
    var = jnp.mean((h - mean) ** 2, axis=-1, keepdims=True)
    return (h - mean) * jax.lax.rsqrt(var + eps) * ln_gamma + ln_beta


def _make_inputs(key, B, S, INTER, HIDDEN):
    k1, k2, k3, k4, k5, k6 = jax.random.split(key, 6)
    hidden_states = jax.random.normal(k1, (B, S, INTER), dtype=jnp.float32)
    input_tensor = jax.random.normal(k2, (B, S, HIDDEN), dtype=jnp.float32)
    w_dense = jax.random.normal(k3, (HIDDEN, INTER), dtype=jnp.float32) * 0.02
    b_dense = jax.random.normal(k4, (HIDDEN,), dtype=jnp.float32) * 0.02
    ln_gamma = jnp.ones((HIDDEN,), dtype=jnp.float32) + \
        0.01 * jax.random.normal(k5, (HIDDEN,), dtype=jnp.float32)
    ln_beta = 0.01 * jax.random.normal(k6, (HIDDEN,), dtype=jnp.float32)
    return hidden_states, input_tensor, w_dense, b_dense, ln_gamma, ln_beta


if __name__ == "__main__":
    EPS = 1e-12
    key = jax.random.PRNGKey(0)
    k_a, k_b = jax.random.split(key)

    # Test 1: main path (K taken whole, weight VMEM-resident), f32.  Small
    # config: intermediate=64, hidden=32, batch=2, seq=8.  B*S=16 is split into
    # two row tiles of 8 so the "parallel" axis has >=2 steps.
    hs, it, w, b, g, be = _make_inputs(k_a, 2, 8, 64, 32)
    out = jax.block_until_ready(alt_roberta_output(hs, it, w, b, g, be, eps=EPS))
    ref = _reference(hs, it, w, b, g, be, eps=EPS)
    assert out.shape == (2, 8, 32)
    assert jnp.allclose(out, ref, atol=1e-5, rtol=1e-5), "mismatch (test 1)"

    # Test 2: streamed-K fallback (K=256 split into 2 steps of 128) and the
    # ragged row tile path (B*S=5, no jnp.pad of the activations).
    hs2, it2, w2, b2_, g2, be2 = _make_inputs(k_b, 1, 5, 256, 128)
    out2 = jax.block_until_ready(
        alt_roberta_output(hs2, it2, w2, b2_, g2, be2, eps=EPS,
                           row_tile=8, k_tile=128))
    ref2 = _reference(hs2, it2, w2, b2_, g2, be2, eps=EPS)
    assert out2.shape == (1, 5, 128)
    assert jnp.allclose(out2, ref2, atol=1e-4, rtol=1e-4), "mismatch (test 2)"

    # Test 3: bf16 matmul inputs (native MXU dtype, 16-row sublane tiles),
    # f32 accumulation + epilogue; compared against the f32 reference.
    out3 = jax.block_until_ready(
        alt_roberta_output(hs, it, w, b, g, be, eps=EPS,
                           matmul_dtype=jnp.bfloat16))
    assert out3.shape == (2, 8, 32)
    assert jnp.allclose(out3, ref, atol=3e-2, rtol=3e-2), "mismatch (test 3)"

    print("KERNEL_OK")
</pallas_src>

<mosaic_0001>
module attributes {stable_mosaic.version = 11 : i64} {
  func.func @_fused_output_kernel(%arg0: i32, %arg1: memref<8x64xf32, #tpu.memory_space<vmem>>, %arg2: memref<64x32xf32, #tpu.memory_space<vmem>>, %arg3: memref<1x32xf32, #tpu.memory_space<vmem>>, %arg4: memref<8x32xf32, #tpu.memory_space<vmem>>, %arg5: memref<1x32xf32, #tpu.memory_space<vmem>>, %arg6: memref<1x32xf32, #tpu.memory_space<vmem>>, %arg7: memref<8x32xf32, #tpu.memory_space<vmem>>) attributes {dimension_semantics = [#tpu.dimension_semantics<parallel>], iteration_bounds = array<i64: 2>, scalar_prefetch = 0 : i64, scratch_operands = 0 : i64, tpu.core_type = #tpu.core_type<tc>, window_params = [{transform_indices = @transform_0, window_bounds = array<i64: 8, 64>}, {pipeline_mode = #tpu.pipeline_mode<synchronous>, transform_indices = @transform_1, window_bounds = array<i64: 64, 32>}, {pipeline_mode = #tpu.pipeline_mode<synchronous>, transform_indices = @transform_2, window_bounds = array<i64: 1, 32>}, {transform_indices = @transform_3, window_bounds = array<i64: 8, 32>}, {pipeline_mode = #tpu.pipeline_mode<synchronous>, transform_indices = @transform_4, window_bounds = array<i64: 1, 32>}, {pipeline_mode = #tpu.pipeline_mode<synchronous>, transform_indices = @transform_5, window_bounds = array<i64: 1, 32>}, {transform_indices = @transform_6, window_bounds = array<i64: 8, 32>}]} {
    %c0 = arith.constant 0 : index
    %c0_0 = arith.constant 0 : index
    %0 = vector.load %arg1[%c0, %c0_0] : memref<8x64xf32, #tpu.memory_space<vmem>>, vector<8x64xf32>
    %c0_1 = arith.constant 0 : index
    %c0_2 = arith.constant 0 : index
    %1 = vector.load %arg2[%c0_1, %c0_2] : memref<64x32xf32, #tpu.memory_space<vmem>>, vector<64x32xf32>
    %cst = arith.constant dense<0.000000e+00> : vector<8x32xf32>
    %2 = tpu.matmul %0, %1, %cst {dimension_numbers = #tpu.dot_dimension_numbers<[1], [0], [0], [1], [0, 0, 1, 1], [], []>} : vector<8x64xf32>, vector<64x32xf32>, vector<8x32xf32> -> vector<8x32xf32>
    %c0_3 = arith.constant 0 : index
    %c0_4 = arith.constant 0 : index
    %3 = vector.load %arg3[%c0_3, %c0_4] : memref<1x32xf32, #tpu.memory_space<vmem>>, vector<1x32xf32>
    %4 = vector.broadcast %3 : vector<1x32xf32> to vector<8x32xf32>
    %5 = arith.addf %2, %4 : vector<8x32xf32>
    %c0_5 = arith.constant 0 : index
    %c0_6 = arith.constant 0 : index
    %6 = vector.load %arg4[%c0_5, %c0_6] : memref<8x32xf32, #tpu.memory_space<vmem>>, vector<8x32xf32>
    %7 = arith.addf %5, %6 : vector<8x32xf32>
    %cst_7 = arith.constant dense<0.000000e+00> : vector<8xf32>
    %8 = vector.multi_reduction <add>, %7, %cst_7 [1] : vector<8x32xf32> to vector<8xf32>
    %9 = vector.shape_cast %8 : vector<8xf32> to vector<8x1xf32>
    %cst_8 = arith.constant 3.200000e+01 : f32
    %10 = vector.broadcast %cst_8 : f32 to vector<8x1xf32>
    %11 = arith.divf %9, %10 : vector<8x1xf32>
    %12 = arith.mulf %7, %7 : vector<8x32xf32>
    %cst_9 = arith.constant dense<0.000000e+00> : vector<8xf32>
    %13 = vector.multi_reduction <add>, %12, %cst_9 [1] : vector<8x32xf32> to vector<8xf32>
    %14 = vector.shape_cast %13 : vector<8xf32> to vector<8x1xf32>
    %cst_10 = arith.constant 3.200000e+01 : f32
    %15 = vector.broadcast %cst_10 : f32 to vector<8x1xf32>
    %16 = arith.divf %14, %15 : vector<8x1xf32>
    %17 = arith.mulf %11, %11 : vector<8x1xf32>
    %18 = arith.subf %16, %17 : vector<8x1xf32>
    %cst_11 = arith.constant 0.000000e+00 : f32
    %19 = vector.broadcast %cst_11 : f32 to vector<8x1xf32>
    %20 = arith.maximumf %18, %19 : vector<8x1xf32>
    %21 = vector.broadcast %11 : vector<8x1xf32> to vector<8x32xf32>
    %22 = arith.subf %7, %21 : vector<8x32xf32>
    %cst_12 = arith.constant 9.99999996E-13 : f32
    %23 = vector.broadcast %cst_12 : f32 to vector<8x1xf32>
    %24 = arith.addf %20, %23 : vector<8x1xf32>
    %25 = math.rsqrt %24 : vector<8x1xf32>
    %26 = vector.broadcast %25 : vector<8x1xf32> to vector<8x32xf32>
    %27 = arith.mulf %22, %26 : vector<8x32xf32>
    %c0_13 = arith.constant 0 : index
    %c0_14 = arith.constant 0 : index
    %28 = vector.load %arg5[%c0_13, %c0_14] : memref<1x32xf32, #tpu.memory_space<vmem>>, vector<1x32xf32>
    %29 = vector.broadcast %28 : vector<1x32xf32> to vector<8x32xf32>
    %30 = arith.mulf %27, %29 : vector<8x32xf32>
    %c0_15 = arith.constant 0 : index
    %c0_16 = arith.constant 0 : index
    %31 = vector.load %arg6[%c0_15, %c0_16] : memref<1x32xf32, #tpu.memory_space<vmem>>, vector<1x32xf32>
    %32 = vector.broadcast %31 : vector<1x32xf32> to vector<8x32xf32>
    %33 = arith.addf %30, %32 : vector<8x32xf32>
    %c0_17 = arith.constant 0 : index
    %c0_18 = arith.constant 0 : index
    %34 = vector.load %arg7[%c0_17, %c0_18] : memref<8x32xf32, #tpu.memory_space<vmem>>, vector<8x32xf32>
    tpu.vector_store %arg7[%c0_17, %c0_18], %33 {strides = array<i32>} : memref<8x32xf32, #tpu.memory_space<vmem>>, vector<8x32xf32>,
    return
  }
  func.func @transform_0(%arg0: i32) -> (i32, i32) {
    %c0_i32 = arith.constant 0 : i32
    %c0_i32_0 = arith.constant 0 : i32
    return %arg0, %c0_i32 : i32, i32
  }
  func.func @transform_1(%arg0: i32) -> (i32, i32) {
    %c0_i32 = arith.constant 0 : i32
    %c0_i32_0 = arith.constant 0 : i32
    %c0_i32_1 = arith.constant 0 : i32
    return %c0_i32, %c0_i32_0 : i32, i32
  }
  func.func @transform_2(%arg0: i32) -> (i32, i32) {
    %c0_i32 = arith.constant 0 : i32
    %c0_i32_0 = arith.constant 0 : i32
    %c0_i32_1 = arith.constant 0 : i32
    return %c0_i32, %c0_i32_0 : i32, i32
  }
  func.func @transform_3(%arg0: i32) -> (i32, i32) {
    %c0_i32 = arith.constant 0 : i32
    %c0_i32_0 = arith.constant 0 : i32
    return %arg0, %c0_i32 : i32, i32
  }
  func.func @transform_4(%arg0: i32) -> (i32, i32) {
    %c0_i32 = arith.constant 0 : i32
    %c0_i32_0 = arith.constant 0 : i32
    %c0_i32_1 = arith.constant 0 : i32
    return %c0_i32, %c0_i32_0 : i32, i32
  }
  func.func @transform_5(%arg0: i32) -> (i32, i32) {
    %c0_i32 = arith.constant 0 : i32
    %c0_i32_0 = arith.constant 0 : i32
    %c0_i32_1 = arith.constant 0 : i32
    return %c0_i32, %c0_i32_0 : i32, i32
  }
  func.func @transform_6(%arg0: i32) -> (i32, i32) {
    %c0_i32 = arith.constant 0 : i32
    %c0_i32_0 = arith.constant 0 : i32
    return %arg0, %c0_i32 : i32, i32
  }
}

</mosaic_0001>

<llo_original>
// kernel: tpu_custom_call.1
$region0: #{tpu_custom_call.1}
  #allocation0 [shape = 'u32[]', space=smem, size = 0x4, offset = 0x4, fixed_abs, tag = 'smem constant byte address 0x4 - core index']
  #allocation1 [shape = 'u32[144,128]{1,0:T(1,128)}', space=vmem, size = 0x12000, scoped, tag = 'internal scratch']
  %s0 = inlined_call_operand.vmem [shape: f32[16,64], index: 0, kind: input, shape index: {}]
  %s1 = inlined_call_operand.vmem [shape: f32[64,32], index: 1, kind: input, shape index: {}]
  %s2 = inlined_call_operand.vmem [shape: f32[1,32], index: 2, kind: input, shape index: {}]
  %s3 = inlined_call_operand.vmem [shape: f32[16,32], index: 3, kind: input, shape index: {}]
  %s4 = inlined_call_operand.vmem [shape: f32[1,32], index: 4, kind: input, shape index: {}]
  %s5 = inlined_call_operand.vmem [shape: f32[1,32], index: 5, kind: input, shape index: {}]
  %s6 = inlined_call_operand.hbm [shape: f32[16,32], index: 6, kind: output, shape index: {}]
  %s7 = sld [smem:[#allocation0]]
  $region57: #{tpu_custom_call.1} parent=0
    _
  %s9 = ssub.s32 1, %s7
  %s10 = scalar_select 0, %s9, %s7
  $region1: #{tpu_custom_call.1} parent=0
    #allocation2 [shape = 'u8[8192]{0}', space=vmem, size = 0x2000, scoped, tag = 'output window, operand 0']
    #allocation3 [shape = 's32[2]{0}', space=sflag, size = 0x8, scoped, tag = 'scoped memory for tpu_custom_call.1']
    %11 = vsyncpa [#allocation3], 0
    %s12 = scalar_lea.sflag [#allocation3], 1
    %13 = vsyncpa %s12, 0
    loop: start=0, step=1, limit=4
    $region2: #{tpu_custom_call.1} parent=1 // loop_pre_header
      _
    $region3: #{tpu_custom_call.1} parent=1 // loop_header
      %s15 = sphi 0, %s19
      %p16 = scmp.ge.s32.totalorder %s15, 4
      %s25 = sphi 0, %s27
      %s28 = sphi 0, %s25
      %s29 = sphi 0, %s28
      %s45 = sphi 0, %s29
      %s49 = sphi 0, %s49
      %s51 = sphi 0, %s49
      %s52 = sphi 0, %s51
      %s66 = sphi 0, %s52
      %s70 = sphi 0, %s70
      %s72 = sphi 0, %s70
      %s73 = sphi 0, %s72
      %s87 = sphi 0, %s73
      %s93 = sphi 0, %s95
      %s96 = sphi 0, %s93
      %s97 = sphi 0, %s96
      %s113 = sphi 0, %s97
      %s117 = sphi 0, %s117
      %s119 = sphi 0, %s117
      %s120 = sphi 0, %s119
      %s134 = sphi 0, %s120
      %s138 = sphi 0, %s138
      %s140 = sphi 0, %s138
      %s141 = sphi 0, %s140
      %s155 = sphi 0, %s141
      %s161 = sphi 0, %s163
      %s164 = sphi 0, %s161
      %s165 = sphi 0, %s164
      %s181 = sphi 0, %s165
    $region4: #{tpu_custom_call.1} parent=1 // loop_header_branch
      %18 = sbr.rel (%p16) target = $region8
    $region5: #{tpu_custom_call.1} parent=1 // loop_body
      %s20 = ssub.s32 %s15, 1
      %s21 = ssub.s32 %s15, 2
      %s22 = sadd.s32 %s15, 1
      %s23 = ssub.s32 %s15, %s22
      %p24 = scmp.eq.s32.totalorder %s23, 0
      %s26 = sadd.s32 %s25, 1
      %s27 = scalar_select %p24, %s25, %s26
      %p30 = pneg %p24
      %p31 = scmp.eq.s32.totalorder %s15, 1
      %p32 = por %p30, %p31
      %p33 = scmp.ne.s32.totalorder %s25, %s28
      %p34 = scmp.eq.s32.totalorder %s15, 0
      %p35 = por %p33, %p34
      %p36 = scmp.ne.s32.totalorder %s25, %s28
      %p37 = scmp.eq.s32.totalorder %s20, 1
      %p38 = por %p36, %p37
      %p39 = scmp.ne.s32.totalorder %s28, %s29
      %p40 = scmp.eq.s32.totalorder %s20, 0
      %p41 = por %p39, %p40
      %p42 = scmp.ne.s32.totalorder %s28, %s29
      %p43 = scmp.eq.s32.totalorder %s21, 1
      %p44 = por %p42, %p43
      %p46 = scmp.ne.s32.totalorder %s29, %s45
      %p47 = scmp.eq.s32.totalorder %s21, 0
      %p48 = por %p46, %p47
      %s50 = sadd.s32 %s49, 1
      %p53 = scmp.eq.s32.totalorder %s15, 1
      %p54 = scmp.ne.s32.totalorder %s49, %s51
      %p55 = scmp.eq.s32.totalorder %s15, 0
      %p56 = por %p54, %p55
      %p57 = scmp.ne.s32.totalorder %s49, %s51
      %p58 = scmp.eq.s32.totalorder %s20, 1
      %p59 = por %p57, %p58
      %p60 = scmp.ne.s32.totalorder %s51, %s52
      %p61 = scmp.eq.s32.totalorder %s20, 0
      %p62 = por %p60, %p61
      %p63 = scmp.ne.s32.totalorder %s51, %s52
      %p64 = scmp.eq.s32.totalorder %s21, 1
      %p65 = por %p63, %p64
      %p67 = scmp.ne.s32.totalorder %s52, %s66
      %p68 = scmp.eq.s32.totalorder %s21, 0
      %p69 = por %p67, %p68
      %s71 = sadd.s32 %s70, 1
      %p74 = scmp.eq.s32.totalorder %s15, 1
      %p75 = scmp.ne.s32.totalorder %s70, %s72
      %p76 = scmp.eq.s32.totalorder %s15, 0
      %p77 = por %p75, %p76
      %p78 = scmp.ne.s32.totalorder %s70, %s72
      %p79 = scmp.eq.s32.totalorder %s20, 1
      %p80 = por %p78, %p79
      %p81 = scmp.ne.s32.totalorder %s72, %s73
      %p82 = scmp.eq.s32.totalorder %s20, 0
      %p83 = por %p81, %p82
      %p84 = scmp.ne.s32.totalorder %s72, %s73
      %p85 = scmp.eq.s32.totalorder %s21, 1
      %p86 = por %p84, %p85
      %p88 = scmp.ne.s32.totalorder %s73, %s87
      %p89 = scmp.eq.s32.totalorder %s21, 0
      %p90 = por %p88, %p89
      %s91 = ssub.s32 %s15, %s22
      %p92 = scmp.eq.s32.totalorder %s91, 0
      %s94 = sadd.s32 %s93, 1
      %s95 = scalar_select %p92, %s93, %s94
      %p98 = pneg %p92
      %p99 = scmp.eq.s32.totalorder %s15, 1
      %p100 = por %p98, %p99
      %p101 = scmp.ne.s32.totalorder %s93, %s96
      %p102 = scmp.eq.s32.totalorder %s15, 0
      %p103 = por %p101, %p102
      %p104 = scmp.ne.s32.totalorder %s93, %s96
      %p105 = scmp.eq.s32.totalorder %s20, 1
      %p106 = por %p104, %p105
      %p107 = scmp.ne.s32.totalorder %s96, %s97
      %p108 = scmp.eq.s32.totalorder %s20, 0
      %p109 = por %p107, %p108
      %p110 = scmp.ne.s32.totalorder %s96, %s97
      %p111 = scmp.eq.s32.totalorder %s21, 1
      %p112 = por %p110, %p111
      %p114 = scmp.ne.s32.totalorder %s97, %s113
      %p115 = scmp.eq.s32.totalorder %s21, 0
      %p116 = por %p114, %p115
      %s118 = sadd.s32 %s117, 1
      %p121 = scmp.eq.s32.totalorder %s15, 1
      %p122 = scmp.ne.s32.totalorder %s117, %s119
      %p123 = scmp.eq.s32.totalorder %s15, 0
      %p124 = por %p122, %p123
      %p125 = scmp.ne.s32.totalorder %s117, %s119
      %p126 = scmp.eq.s32.totalorder %s20, 1
      %p127 = por %p125, %p126
      %p128 = scmp.ne.s32.totalorder %s119, %s120
      %p129 = scmp.eq.s32.totalorder %s20, 0
      %p130 = por %p128, %p129
      %p131 = scmp.ne.s32.totalorder %s119, %s120
      %p132 = scmp.eq.s32.totalorder %s21, 1
      %p133 = por %p131, %p132
      %p135 = scmp.ne.s32.totalorder %s120, %s134
      %p136 = scmp.eq.s32.totalorder %s21, 0
      %p137 = por %p135, %p136
      %s139 = sadd.s32 %s138, 1
      %p142 = scmp.eq.s32.totalorder %s15, 1
      %p143 = scmp.ne.s32.totalorder %s138, %s140
      %p144 = scmp.eq.s32.totalorder %s15, 0
      %p145 = por %p143, %p144
      %p146 = scmp.ne.s32.totalorder %s138, %s140
      %p147 = scmp.eq.s32.totalorder %s20, 1
      %p148 = por %p146, %p147
      %p149 = scmp.ne.s32.totalorder %s140, %s141
      %p150 = scmp.eq.s32.totalorder %s20, 0
      %p151 = por %p149, %p150
      %p152 = scmp.ne.s32.totalorder %s140, %s141
      %p153 = scmp.eq.s32.totalorder %s21, 1
      %p154 = por %p152, %p153
      %p156 = scmp.ne.s32.totalorder %s141, %s155
      %p157 = scmp.eq.s32.totalorder %s21, 0
      %p158 = por %p156, %p157
      %s159 = ssub.s32 %s15, %s22
      %p160 = scmp.eq.s32.totalorder %s159, 0
      %s162 = sadd.s32 %s161, 1
      %s163 = scalar_select %p160, %s161, %s162
      %p166 = pneg %p160
      %p167 = scmp.eq.s32.totalorder %s15, 1
      %p168 = por %p166, %p167
      %p169 = scmp.ne.s32.totalorder %s161, %s164
      %p170 = scmp.eq.s32.totalorder %s15, 0
      %p171 = por %p169, %p170
      %p172 = scmp.ne.s32.totalorder %s161, %s164
      %p173 = scmp.eq.s32.totalorder %s20, 1
      %p174 = por %p172, %p173
      %p175 = scmp.ne.s32.totalorder %s164, %s165
      %p176 = scmp.eq.s32.totalorder %s20, 0
      %p177 = por %p175, %p176
      %p178 = scmp.ne.s32.totalorder %s164, %s165
      %p179 = scmp.eq.s32.totalorder %s21, 1
      %p180 = por %p178, %p179
      %p182 = scmp.ne.s32.totalorder %s165, %s181
      %p183 = scmp.eq.s32.totalorder %s21, 0
      %p184 = por %p182, %p183
      %p185 = scmp.le.s32.totalorder 1, %s15
      %p186 = scmp.lt.s32.totalorder %s15, 3
      %p187 = pnand %p185, %p186
      %p188 = pneg %p187
      // Predicated region
      $region9: #{tpu_custom_call.1} parent=5 // pred_check
        _
      $region10: #{tpu_custom_call.1} parent=5 // pred_check_branch
        %190 = sbr.rel (%p187) target = $region12
      $region11: #{tpu_custom_call.1} parent=5 // pred_region
        %s191 = ssub.s32 %s15, 1
        // Predicated region
        $region13: #{tpu_custom_call.1} parent=11 // pred_check
          %p192 = pneg %p62
        $region14: #{tpu_custom_call.1} parent=11 // pred_check_branch
          %194 = sbr.rel (%p192) target = $region16
        $region15: #{tpu_custom_call.1} parent=11 // pred_region
          _
        $region16: #{tpu_custom_call.1} parent=11 // pred_fallthru
          _
        // Predicated region
        $region17: #{tpu_custom_call.1} parent=11 // pred_check
          %p195 = pneg %p83
        $region18: #{tpu_custom_call.1} parent=11 // pred_check_branch
          %197 = sbr.rel (%p195) target = $region20
        $region19: #{tpu_custom_call.1} parent=11 // pred_region
          _
        $region20: #{tpu_custom_call.1} parent=11 // pred_fallthru
          _
        // Predicated region
        $region21: #{tpu_custom_call.1} parent=11 // pred_check
          %p198 = pneg %p130
        $region22: #{tpu_custom_call.1} parent=11 // pred_check_branch
          %200 = sbr.rel (%p198) target = $region24
        $region23: #{tpu_custom_call.1} parent=11 // pred_region
          _
        $region24: #{tpu_custom_call.1} parent=11 // pred_fallthru
          _
        // Predicated region
        $region25: #{tpu_custom_call.1} parent=11 // pred_check
          %p201 = pneg %p151
        $region26: #{tpu_custom_call.1} parent=11 // pred_check_branch
          %203 = sbr.rel (%p201) target = $region28
        $region27: #{tpu_custom_call.1} parent=11 // pred_region
          _
        $region28: #{tpu_custom_call.1} parent=11 // pred_fallthru
          _
      $region12: #{tpu_custom_call.1} parent=5 // pred_fallthru
        _
      %p204 = scmp.lt.s32.totalorder %s15, 2
      // Predicated region
      $region29: #{tpu_custom_call.1} parent=5 // pred_check
        %p205 = pneg %p204
      $region30: #{tpu_custom_call.1} parent=5 // pred_check_branch
        %207 = sbr.rel (%p205) target = $region32
      $region31: #{tpu_custom_call.1} parent=5 // pred_region
        // Predicated region
        $region33: #{tpu_custom_call.1} parent=31 // pred_check
          %p208 = pneg %p35
        $region34: #{tpu_custom_call.1} parent=31 // pred_check_branch
          %210 = sbr.rel (%p208) target = $region36
        $region35: #{tpu_custom_call.1} parent=31 // pred_region
          %p211 = scmp.lt.s32.totalorder %s15, 1
          %s212 = scalar_select %p211, %s15, 1
          %s213 = smul.addr %s212, 8
          %s214 = scalar_lea.vmem %s0, %s213
        $region36: #{tpu_custom_call.1} parent=31 // pred_fallthru
          _
        // Predicated region
        $region37: #{tpu_custom_call.1} parent=31 // pred_check
          %p215 = pneg %p103
        $region38: #{tpu_custom_call.1} parent=31 // pred_check_branch
          %217 = sbr.rel (%p215) target = $region40
        $region39: #{tpu_custom_call.1} parent=31 // pred_region
          %p218 = scmp.lt.s32.totalorder %s15, 1
          %s219 = scalar_select %p218, %s15, 1
          %s220 = smul.addr %s219, 8
          %s221 = scalar_lea.vmem %s3, %s220
        $region40: #{tpu_custom_call.1} parent=31 // pred_fallthru
          _
      $region32: #{tpu_custom_call.1} parent=5 // pred_fallthru
        _
      %p222 = scmp.le.s32.totalorder 1, %s15
      %p223 = scmp.lt.s32.totalorder %s15, 3
      %p224 = pnand %p222, %p223
      %p225 = pneg %p224
      // Predicated region
      $region41: #{tpu_custom_call.1} parent=5 // pred_check
        _
      $region42: #{tpu_custom_call.1} parent=5 // pred_check_branch
        %227 = sbr.rel (%p224) target = $region44
      $region43: #{tpu_custom_call.1} parent=5 // pred_region
        %s228 = ssub.s32 %s15, 1
        %p229 = scmp.lt.s32.totalorder %s20, 1
        %s230 = scalar_select %p229, %s20, 1
        %s231 = smul.addr %s230, 8
        %s232 = scalar_lea.vmem %s0, %s231
        %p233 = pneg %p41
        %p234 = pneg %p38
        %p235 = pneg %p62
        %p236 = pneg %p59
        %p237 = pneg %p83
        %p238 = pneg %p80
        %p239 = scmp.lt.s32.totalorder %s20, 1
        %s240 = scalar_select %p239, %s20, 1
        %s241 = smul.addr %s240, 8
        %s242 = scalar_lea.vmem %s3, %s241
        %p243 = pneg %p109
        %p244 = pneg %p106
        %p245 = pneg %p130
        %p246 = pneg %p127
        %p247 = pneg %p151
        %p248 = pneg %p148
        %p249 = pneg %p177
        %p250 = pneg %p174
        %s251 = sand.u32 %s164, 1
        %s252 = scalar_lea.sflag [#allocation3], %s251
        %s253 = sand.u32 %s164, 1
        %s254 = smul.addr %s253, 8
        %s255 = scalar_lea.vmem [#allocation2], %s254
        %p256 = scmp.lt.s32.totalorder %s20, 1
        %s257 = scalar_select %p256, %s20, 1
        %s258 = smul.addr %s257, 8
        %s259 = scalar_lea.vmem %s0, %s258
        %p260 = scmp.lt.s32.totalorder %s20, 1
        %s261 = scalar_select %p260, %s20, 1
        %s262 = smul.addr %s261, 8
        %s263 = scalar_lea.vmem %s3, %s262
        %v264 = vld [vmem:[%s259] sm:$0xff]
        %v265 = vld [vmem:[%s1] sm:$0xff]
        %v266 = vld [vmem:[%s1 + $0x8] sm:$0xff]
        %v267 = vld [vmem:[%s1 + $0x10] sm:$0xff]
        %v268 = vld [vmem:[%s1 + $0x18] sm:$0xff]
        %v269 = vld [vmem:[%s1 + $0x20] sm:$0xff]
        %v270 = vld [vmem:[%s1 + $0x28] sm:$0xff]
        %v271 = vld [vmem:[%s1 + $0x30] sm:$0xff]
        %v272 = vld [vmem:[%s1 + $0x38] sm:$0xff]
        %v273 = vld [vmem:[%s2] sm:$0x1]
        %v275 = vlaneseq
        %v276 = vshrl.u32 %v275, 7
        %v277 = vsub.s32 0, %v276
        %v278 = vrot.slane %v273, %v277
        %vm280 = vcmask 523264
        %v282 = vsel %vm280, %v264, 0
        %284 = vmatprep.subr.mxu0 0.0
        %285 = vmatpush1.msra.mxu0 %v265
        %286 = vmatprep.subr.mxu0 0.0
        %287 = vmatpush1.msra.mxu0 %v266
        %288 = vmatprep.subr.mxu0 0.0
        %289 = vmatpush1.msra.mxu0 %v267
        %290 = vmatprep.subr.mxu0 0.0
        %291 = vmatpush1.msra.mxu0 %v268
        %292 = vmatprep.subr.mxu0 0.0
        %293 = vmatpush1.msra.mxu0 %v269
        %294 = vmatprep.subr.mxu0 0.0
        %295 = vmatpush1.msra.mxu0 %v270
        %296 = vmatprep.subr.mxu0 0.0
        %297 = vmatpush1.msra.mxu0 %v271
        %298 = vmatprep.subr.mxu0 0.0
        %299 = vmatpush1.msra.mxu0 %v272
        %300 = vmatprep.subr.mxu0 0.0
        %301 = vmatpush1.msra.mxu0 0.0
        %302 = vmatprep.subr.mxu0 0.0
        %303 = vmatpush1.msra.mxu0 0.0
        %304 = vmatprep.subr.mxu0 0.0
        %305 = vmatpush1.msra.mxu0 0.0
        %306 = vmatprep.subr.mxu0 0.0
        %307 = vmatpush1.msra.mxu0 0.0
        %308 = vmatprep.subr.mxu0 0.0
        %309 = vmatpush1.msra.mxu0 0.0
        %310 = vmatprep.subr.mxu0 0.0
        %311 = vmatpush1.msra.mxu0 0.0
        %312 = vmatprep.subr.mxu0 0.0
        %313 = vmatpush1.msra.mxu0 0.0
        %314 = vmatprep.subr.mxu0 0.0
        %315 = vmatpush1.msra.mxu0 0.0
        %316 = vmatprep.subr.mxu0 0.0
        %317 = vmatpush1.msra.mxu0 0.0
        %318 = vmatprep.subr.mxu0 0.0
        %319 = vmatpush1.msra.mxu0 0.0
        %320 = vmatprep.subr.mxu0 0.0
        %321 = vmatpush1.msra.mxu0 0.0
        %322 = vmatprep.subr.mxu0 0.0
        %323 = vmatpush1.msra.mxu0 0.0
        %324 = vmatprep.subr.mxu0 0.0
        %325 = vmatpush1.msra.mxu0 0.0
        %326 = vmatprep.subr.mxu0 0.0
        %327 = vmatpush1.msra.mxu0 0.0
        %328 = vmatprep.subr.mxu0 0.0
        %329 = vmatpush1.msra.mxu0 0.0
        %330 = vmatprep.subr.mxu0 0.0
        %331 = vmatpush1.msra.mxu0 0.0
        %332 = vmatprep.subr.mxu0 0.0
        %333 = vmatpush1.msra.mxu0 0.0
        %334 = vmatprep.subr.mxu0 0.0
        %335 = vmatpush1.msra.mxu0 0.0
        %336 = vmatprep.subr.mxu0 0.0
        %337 = vmatpush1.msra.mxu0 0.0
        %338 = vmatprep.subr.mxu0 0.0
        %339 = vmatpush1.msra.mxu0 0.0
        %340 = vmatprep.subr.mxu0 0.0
        %341 = vmatpush1.msra.mxu0 0.0
        %342 = vmatprep.subr.mxu0 0.0
        %343 = vmatpush1.msra.mxu0 0.0
        %344 = vmatprep.subr.mxu0 0.0
        %345 = vmatpush1.msra.mxu0 0.0
        %346 = vmatprep.subr.mxu0 0.0
        %347 = vmatpush1.msra.mxu0 0.0
        %348 = vmatprep.mubr.f32.mxu0 0.0
        %349 = vmatmul.mubr.f32.gmra.mrb[0].mxu0 %v282
        %v350 = vpop.f32.mrb[0].mxu0
        %v351 = vadd.f32 %v278, %v350
        %v352 = vpop.f32.mrb[0].mxu0
        %353 = vdwg.mxu0
        %v354 = vld [vmem:[%s263] sm:$0xff]
        %v355 = vadd.f32 %v351, %v354
        %vm356 = vcmask 261120
        %v357 = vsel %vm356, %v355, 0.0
        %358 = vadd.xlane.f32.xlu0 %v357
        %v359 = vpop.xlane.xlu0 %358
        %v360 = vrcp.pop 32.0
        %v361 = vmul.f32 %v359, %v360
        %v362 = vmul.f32 %v355, %v355
        %v363 = vsel %vm356, %v362, 0.0
        %364 = vadd.xlane.f32.xlu0 %v363
        %v365 = vpop.xlane.xlu0 %364
        %v366 = vmul.f32 %v365, %v360
        %v367 = vmul.f32 %v361, %v361
        %v368 = vsub.f32 %v366, %v367
        %v369 = vmax.f32 %v368, 0.0
        %v370 = vsub.f32 %v355, %v361
        %v371 = vadd.f32 %v369, 1e-12
        %v372 = vrsqrt.pop %v371
        %v373 = vmul.f32 %v370, %v372
        %v374 = vld [vmem:[%s4] sm:$0x1]
        %v376 = vlaneseq
        %v377 = vshrl.u32 %v376, 7
        %v378 = vsub.s32 0, %v377
        %v379 = vrot.slane %v374, %v378
        %v381 = vmul.f32 %v373, %v379
        %v382 = vld [vmem:[%s5] sm:$0x1]
        %v384 = vlaneseq
        %v385 = vshrl.u32 %v384, 7
        %v386 = vsub.s32 0, %v385
        %v387 = vrot.slane %v382, %v386
        %v389 = vadd.f32 %v381, %v387
        %390 = vst.msk [vmem:[%s255] sm:$0xff] %vm356, %v389
        %s391 = sand.u32 %s164, 1
        %s392 = scalar_lea.sflag [#allocation3], %s391
        %s393 = sand.u32 %s164, 1
        %s394 = smul.addr %s393, 8
        %s395 = scalar_lea.vmem [#allocation2], %s394
        // Predicated region
        $region45: #{tpu_custom_call.1} parent=43 // pred_check
          %p396 = pneg %p174
        $region46: #{tpu_custom_call.1} parent=43 // pred_check_branch
          %398 = sbr.rel (%p396) target = $region48
        $region47: #{tpu_custom_call.1} parent=43 // pred_region
          %s400 = ssub.s32 128, 128
          %401 = vsyncadd %s392, %s400
          %s402 = smul.addr %s20, 128
          %s403 = scalar_lea.hbm %s6, %s402
          %s405 = sshll.u32 %s395, 4
          %s406 = int_to_ptr.vmem [resolvable:$true] %s405
          %408 = dma.vmem_to_hbm [thread:$0]  %s406, 128, %s403, %s392
        $region48: #{tpu_custom_call.1} parent=43 // pred_fallthru
          _
      $region44: #{tpu_custom_call.1} parent=5 // pred_fallthru
        _
      %p409 = scmp.le.s32.totalorder 2, %s15
      // Predicated region
      $region49: #{tpu_custom_call.1} parent=5 // pred_check
        %p410 = pneg %p409
      $region50: #{tpu_custom_call.1} parent=5 // pred_check_branch
        %412 = sbr.rel (%p410) target = $region52
      $region51: #{tpu_custom_call.1} parent=5 // pred_region
        %s413 = ssub.s32 %s15, 2
        // Predicated region
        $region53: #{tpu_custom_call.1} parent=51 // pred_check
          %p414 = pneg %p180
        $region54: #{tpu_custom_call.1} parent=51 // pred_check_branch
          %416 = sbr.rel (%p414) target = $region56
        $region55: #{tpu_custom_call.1} parent=51 // pred_region
          %s417 = sand.u32 %s165, 1
          %s418 = scalar_lea.sflag [#allocation3], %s417
          %s419 = sand.u32 %s165, 1
          %s420 = smul.addr %s419, 8
          %s421 = scalar_lea.vmem [#allocation2], %s420
          %422 = dma.done %s418, 128
        $region56: #{tpu_custom_call.1} parent=51 // pred_fallthru
          _
      $region52: #{tpu_custom_call.1} parent=5 // pred_fallthru
        _
    $region6: #{tpu_custom_call.1} parent=1 // loop_footer
      %s19 = sadd.s32 1, %s15
    $region7: #{tpu_custom_call.1} parent=1 // loop_footer_branch
      %14 = sbr.rel target = $region3
    $region8: #{tpu_custom_call.1} parent=1 // loop_exit
      _
    %423 = vsyncpa [#allocation3], 1
    %s424 = scalar_lea.sflag [#allocation3], 1
    %425 = vsyncpa %s424, 1

</llo_original>
